<compile_context>
chip_gen: v5e
topology: v5e:2x2
jax: 0.10.0
libtpu: 0.0.40
codegen_flags: <defaults>
</compile_context>

<pallas_src>
import functools

import jax
import jax.numpy as jnp
from jax.experimental import pallas as pl
from jax.experimental.pallas import tpu as pltpu


def _self_attn_kernel(x_ref, wvq_ref, bvq_ref, wk_ref, bk_ref, gamma_ref,
                      out_ref, *rest, seq_tile, c, c8, write_attn,
                      compute_dtype, softmax_dtype, recip_approx):
    """Grid = (batch, query-tile).

    x_ref    : (1, HW, C)   full sequence for this batch element (resident
                            across query tiles: same block index over qi)
    wvq_ref  : (C, C + C8)  fused, pre-transposed [Wv | Wq]
    bvq_ref  : (1, C + C8)  fused [bv | bq] bias (f32)
    wk_ref   : (C8, C)      key weight (original layout) in compute dtype
    bk_ref   : (C8, 1)      key bias (f32, broadcast along lanes)
    gamma_ref: (1, 1)       residual gate, SMEM scalar
    out_ref  : (1, TQ, C)   gamma * attn(V) + x for this query tile
    attn_ref : (1, TQ, HW)  softmax attention rows (only if write_attn)
    scratch  : q (HW, C8), kT (C8, HW), v (HW, C) in compute dtype, filled once
               per batch element at qi == 0 and reused for every query tile.
    """
    if write_attn:
        attn_ref = rest[0]
        q_scr, kt_scr, v_scr = rest[1:]
    else:
        q_scr, kt_scr, v_scr = rest

    qi = pl.program_id(1)

    @pl.when(qi == 0)
    def _project_qkv():
        # Fused lane-dense [v | q] projection, once per batch element.
        x_full = x_ref[0].astype(compute_dtype)                        # (HW, C)
        p = jnp.dot(x_full, wvq_ref[...],
                    preferred_element_type=jnp.float32) + bvq_ref[...]  # (HW, C+C8)
        v_scr[...] = p[:, :c].astype(compute_dtype)
        q_scr[...] = p[:, c:].astype(compute_dtype)
        # k^T computed directly as (C8, HW): Wk @ x^T via dot_general
        # contracting the channel axes -> lane-dense scratch, transpose cost
        # amortized to once per batch element.
        kt = jax.lax.dot_general(
            wk_ref[...], x_full, (((1,), (1,)), ((), ())),
            preferred_element_type=jnp.float32) + bk_ref[...]           # (C8, HW)
        kt_scr[...] = kt.astype(compute_dtype)

    row = pl.multiple_of(qi * seq_tile, seq_tile)
    q = q_scr[pl.ds(row, seq_tile), :]                                  # (TQ, C8)

    # energy[i, j] = <q_i, k_j>; standard (M,K)@(K,N) against resident kT.
    energy = jnp.dot(q, kt_scr[...],
                     preferred_element_type=jnp.float32)                # (TQ, HW)

    # Numerically-stable softmax over keys; exp optionally in bf16 (v6e/v7x),
    # accumulation of the denominator always in f32.
    m = jnp.max(energy, axis=-1, keepdims=True)
    e = jnp.exp((energy - m).astype(softmax_dtype))
    denom = jnp.sum(e.astype(jnp.float32), axis=-1, keepdims=True)
    inv = pl.reciprocal(denom, approx=recip_approx)

    x_tile = x_ref[0, pl.ds(row, seq_tile), :]                          # (TQ, C) f32
    gamma = gamma_ref[0, 0]

    if write_attn:
        attn = e * inv.astype(e.dtype)                                  # (TQ, HW)
        attn_ref[0] = attn.astype(attn_ref.dtype)
        ov = jnp.dot(attn.astype(compute_dtype), v_scr[...],
                     preferred_element_type=jnp.float32)                # (TQ, C)
    else:
        # Fold 1/sum into the (TQ, C) output instead of the (TQ, HW) tile.
        ov = jnp.dot(e.astype(compute_dtype), v_scr[...],
                     preferred_element_type=jnp.float32) * inv

    out_ref[0] = (gamma * ov + x_tile).astype(out_ref.dtype)


def _choose_q_tile(hw, requested):
    """Largest multiple of 8 that divides hw and is <= requested (else hw)."""
    if hw <= requested or hw % 8 != 0:
        return hw
    t = (min(requested, hw) // 8) * 8
    while t >= 8:
        if hw % t == 0:
            return t
        t -= 8
    return hw


def _round_up(v, m):
    return ((v + m - 1) // m) * m


@functools.partial(
    jax.jit,
    static_argnames=("seq_tile", "return_attention", "compute_dtype",
                     "softmax_dtype", "attn_dtype", "recip_approx"))
def self_attn(x_nchw, wq, bq, wk, bk, wv, bv, gamma, *,
              seq_tile=256, return_attention=False,
              compute_dtype=jnp.bfloat16, softmax_dtype=jnp.float32,
              attn_dtype=jnp.bfloat16, recip_approx=True):
    """SAGAN Self_Attn forward.

    x_nchw: (N, C, H, W) f32.
    Returns (out (N, C, H, W) f32, attention (N, HW, HW) or None).
    """
    N, C, H, W = x_nchw.shape
    HW = H * W
    C8 = wq.shape[0]
    tq = _choose_q_tile(HW, seq_tile)
    n_q_tiles = HW // tq

    # NCHW -> (N, HW, C): channels on the lane axis.
    x_seq = jnp.transpose(x_nchw.reshape(N, C, HW), (0, 2, 1))

    # Fused, pre-transposed [v | q] projection weights; k kept separate so the
    # kernel can emit k^T (C8, HW) directly.
    w_vq = jnp.concatenate([wv.T, wq.T], axis=1).astype(compute_dtype)  # (C, C+C8)
    b_vq = jnp.concatenate([bv, bq]).reshape(1, C + C8).astype(jnp.float32)
    wk_c = wk.astype(compute_dtype)                                     # (C8, C)
    bk_col = bk.reshape(C8, 1).astype(jnp.float32)
    gamma2 = gamma.reshape(1, 1).astype(jnp.float32)

    kernel = functools.partial(
        _self_attn_kernel, seq_tile=tq, c=C, c8=C8,
        write_attn=return_attention, compute_dtype=compute_dtype,
        softmax_dtype=softmax_dtype, recip_approx=recip_approx)

    in_specs = [
        pl.BlockSpec((1, HW, C), lambda n, qi: (n, 0, 0)),   # x (full, resident)
        pl.BlockSpec((C, C + C8), lambda n, qi: (0, 0)),     # fused [Wv|Wq]^T
        pl.BlockSpec((1, C + C8), lambda n, qi: (0, 0)),     # fused [bv|bq]
        pl.BlockSpec((C8, C), lambda n, qi: (0, 0)),         # Wk
        pl.BlockSpec((C8, 1), lambda n, qi: (0, 0)),         # bk (column)
        pl.BlockSpec(memory_space=pltpu.MemorySpace.SMEM),   # gamma scalar
    ]
    out_block = pl.BlockSpec((1, tq, C), lambda n, qi: (n, qi, 0))
    if return_attention:
        out_shape = (jax.ShapeDtypeStruct((N, HW, C), jnp.float32),
                     jax.ShapeDtypeStruct((N, HW, HW), attn_dtype))
        out_specs = [out_block,
                     pl.BlockSpec((1, tq, HW), lambda n, qi: (n, qi, 0))]
    else:
        out_shape = jax.ShapeDtypeStruct((N, HW, C), jnp.float32)
        out_specs = out_block

    # ---- VMEM budget (double-buffered pipelined blocks + resident scratch) ----
    cd = jnp.dtype(compute_dtype).itemsize
    lane, sub = 128, (16 if cd == 2 else 8)
    est = 2 * (HW * _round_up(C, lane) * 4                              # x
               + _round_up(C, sub) * _round_up(C + C8, lane) * cd       # w_vq
               + 8 * _round_up(C + C8, lane) * 4                        # b_vq
               + _round_up(C8, sub) * _round_up(C, lane) * cd           # wk
               + _round_up(C8, 8) * lane * 4                            # bk
               + tq * _round_up(C, lane) * 4)                           # out
    if return_attention:
        est += 2 * tq * _round_up(HW, lane) * jnp.dtype(attn_dtype).itemsize
    est += HW * _round_up(C8, lane) * cd                                # q scratch
    est += _round_up(C8, sub) * _round_up(HW, lane) * cd                # kT scratch
    est += HW * _round_up(C, lane) * cd                                 # v scratch
    est += HW * _round_up(C + C8, lane) * 4                             # proj tmp
    est += 4 * tq * _round_up(HW, lane) * 4                             # softmax tmps

    try:
        phys_vmem = int(pltpu.get_tpu_info().vmem_capacity_bytes)
    except Exception:
        phys_vmem = 64 * 1024 * 1024   # conservative (v7x per-core)
    vmem_limit = int(min(max(est * 1.25, 32 * 1024 * 1024),
                         int(phys_vmem * 0.9)))

    scratch_shapes = [
        pltpu.VMEM((HW, C8), compute_dtype),   # q
        pltpu.VMEM((C8, HW), compute_dtype),   # k^T (lane-dense)
        pltpu.VMEM((HW, C), compute_dtype),    # v
    ]

    result = pl.pallas_call(
        kernel,
        out_shape=out_shape,
        grid_spec=pltpu.PrefetchScalarGridSpec(
            num_scalar_prefetch=0,
            grid=(N, n_q_tiles),
            in_specs=in_specs,
            out_specs=out_specs,
            scratch_shapes=scratch_shapes,
        ),
        compiler_params=pltpu.CompilerParams(
            dimension_semantics=("parallel", "arbitrary"),
            vmem_limit_bytes=vmem_limit,
        ),
    )(x_seq, w_vq, b_vq, wk_c, bk_col, gamma2)

    if return_attention:
        out_seq, attn = result
    else:
        out_seq, attn = result, None

    out_nchw = jnp.transpose(out_seq, (0, 2, 1)).reshape(N, C, H, W)
    return out_nchw, attn


def reference_self_attn(x, wq, bq, wk, bk, wv, bv, gamma):
    """Pure-JAX reference mirroring the PyTorch forward (NCHW)."""
    N, C, H, W = x.shape
    HW = H * W
    xf = x.reshape(N, C, HW)                                      # (N, C, HW)
    q = jnp.einsum("oc,ncp->nop", wq, xf) + bq[None, :, None]     # (N, C8, HW)
    k = jnp.einsum("oc,ncp->nop", wk, xf) + bk[None, :, None]
    v = jnp.einsum("oc,ncp->nop", wv, xf) + bv[None, :, None]
    energy = jnp.einsum("nci,ncj->nij", q, k)                     # (N, HW, HW)
    attn = jax.nn.softmax(energy, axis=-1)
    out = jnp.einsum("ncj,nij->nci", v, attn)                     # (N, C, HW)
    out = out.reshape(N, C, H, W)
    return gamma[0] * out + x, attn


if __name__ == "__main__":
    # Small shapes consistent with Self_Attn (in_dim must be >= 8).
    N, C, H, W = 2, 16, 8, 8
    C8 = C // 8
    HW = H * W

    key = jax.random.PRNGKey(0)
    kx, kq, kk, kv, kbq, kbk, kbv = jax.random.split(key, 7)

    x = jax.random.normal(kx, (N, C, H, W), dtype=jnp.float32)
    wq = 0.1 * jax.random.normal(kq, (C8, C), dtype=jnp.float32)
    wk = 0.1 * jax.random.normal(kk, (C8, C), dtype=jnp.float32)
    wv = 0.1 * jax.random.normal(kv, (C, C), dtype=jnp.float32)
    bq = 0.05 * jax.random.normal(kbq, (C8,), dtype=jnp.float32)
    bk = 0.05 * jax.random.normal(kbk, (C8,), dtype=jnp.float32)
    bv = 0.05 * jax.random.normal(kbv, (C,), dtype=jnp.float32)
    # PyTorch inits gamma to 0; use nonzero so the attention path is exercised.
    gamma = jnp.array([0.5], dtype=jnp.float32)

    ref_out, ref_attn = reference_self_attn(x, wq, bq, wk, bk, wv, bv, gamma)

    # 1) Exact f32 path with the attention output (full Self_Attn contract).
    #    seq_tile=32 forces a 2-tile query grid (tests scratch reuse / tiling).
    out, attn = self_attn(x, wq, bq, wk, bk, wv, bv, gamma,
                          seq_tile=32, return_attention=True,
                          compute_dtype=jnp.float32,
                          softmax_dtype=jnp.float32,
                          attn_dtype=jnp.float32,
                          recip_approx=False)
    out, attn = jax.block_until_ready((out, attn))
    assert out.shape == (N, C, H, W) and attn.shape == (N, HW, HW)
    assert jnp.allclose(out, ref_out, atol=1e-5, rtol=1e-5)
    assert jnp.allclose(attn, ref_attn, atol=1e-5, rtol=1e-5)

    # 2) Default perf path: bf16 matmuls (f32 accum), approx reciprocal, and NO
    #    attention writeback — this is how ConvGenTime consumes the layer.
    out_def, attn_def = self_attn(x, wq, bq, wk, bk, wv, bv, gamma, seq_tile=32)
    out_def = jax.block_until_ready(out_def)
    assert attn_def is None
    assert jnp.allclose(out_def, ref_out, atol=5e-2, rtol=5e-2)

    # 3) Full bf16 path (v6e/v7x style): bf16 matmuls + bf16 softmax + bf16
    #    attention writeback.
    out_bf, attn_bf = self_attn(x, wq, bq, wk, bk, wv, bv, gamma,
                                seq_tile=32, return_attention=True,
                                compute_dtype=jnp.bfloat16,
                                softmax_dtype=jnp.bfloat16,
                                attn_dtype=jnp.bfloat16)
    out_bf, attn_bf = jax.block_until_ready((out_bf, attn_bf))
    assert jnp.allclose(out_bf, ref_out, atol=5e-2, rtol=5e-2)
    assert jnp.allclose(attn_bf.astype(jnp.float32), ref_attn,
                        atol=5e-2, rtol=5e-2)

    print("KERNEL_OK")
</pallas_src>

<mosaic_0001>
module attributes {stable_mosaic.version = 11 : i64} {
  func.func @_self_attn_kernel(%arg0: i32, %arg1: i32, %arg2: memref<1x64x16xf32, #tpu.memory_space<vmem>>, %arg3: memref<16x18xf32, #tpu.memory_space<vmem>>, %arg4: memref<1x18xf32, #tpu.memory_space<vmem>>, %arg5: memref<2x16xf32, #tpu.memory_space<vmem>>, %arg6: memref<2x1xf32, #tpu.memory_space<vmem>>, %arg7: memref<1x1xf32, #tpu.memory_space<smem>>, %arg8: memref<1x32x16xf32, #tpu.memory_space<vmem>>, %arg9: memref<1x32x64xf32, #tpu.memory_space<vmem>>, %arg10: memref<64x2xf32, #tpu.memory_space<vmem>>, %arg11: memref<2x64xf32, #tpu.memory_space<vmem>>, %arg12: memref<64x16xf32, #tpu.memory_space<vmem>>) attributes {dimension_semantics = [#tpu.dimension_semantics<parallel>, #tpu.dimension_semantics<arbitrary>], iteration_bounds = array<i64: 2, 2>, scalar_prefetch = 0 : i64, scratch_operands = 3 : i64, tpu.core_type = #tpu.core_type<tc>, window_params = [{transform_indices = @transform_0, window_bounds = array<i64: 1, 64, 16>}, {pipeline_mode = #tpu.pipeline_mode<synchronous>, transform_indices = @transform_1, window_bounds = array<i64: 16, 18>}, {pipeline_mode = #tpu.pipeline_mode<synchronous>, transform_indices = @transform_2, window_bounds = array<i64: 1, 18>}, {pipeline_mode = #tpu.pipeline_mode<synchronous>, transform_indices = @transform_3, window_bounds = array<i64: 2, 16>}, {pipeline_mode = #tpu.pipeline_mode<synchronous>, transform_indices = @transform_4, window_bounds = array<i64: 2, 1>}, {transform_indices = @transform_5, window_bounds = array<i64: 1, 1>}, {transform_indices = @transform_6, window_bounds = array<i64: 1, 32, 16>}, {transform_indices = @transform_7, window_bounds = array<i64: 1, 32, 64>}]} {
    %c0_i32 = arith.constant 0 : i32
    %0 = arith.cmpi eq, %arg1, %c0_i32 : i32
    %1 = arith.extui %0 : i1 to i32
    %c0_i32_0 = arith.constant 0 : i32
    %2 = arith.cmpi ne, %1, %c0_i32_0 : i32
    scf.if %2 {
      %c0_18 = arith.constant 0 : index
      %c0_19 = arith.constant 0 : index
      %c0_20 = arith.constant 0 : index
      %34 = vector.load %arg2[%c0_18, %c0_19, %c0_20] : memref<1x64x16xf32, #tpu.memory_space<vmem>>, vector<1x64x16xf32>
      %35 = vector.shape_cast %34 : vector<1x64x16xf32> to vector<64x16xf32>
      %c0_21 = arith.constant 0 : index
      %c0_22 = arith.constant 0 : index
      %36 = vector.load %arg3[%c0_21, %c0_22] : memref<16x18xf32, #tpu.memory_space<vmem>>, vector<16x18xf32>
      %cst_23 = arith.constant dense<0.000000e+00> : vector<64x18xf32>
      %37 = tpu.matmul %35, %36, %cst_23 {dimension_numbers = #tpu.dot_dimension_numbers<[1], [0], [0], [1], [0, 0, 1, 1], [], []>} : vector<64x16xf32>, vector<16x18xf32>, vector<64x18xf32> -> vector<64x18xf32>
      %c0_24 = arith.constant 0 : index
      %c0_25 = arith.constant 0 : index
      %38 = vector.load %arg4[%c0_24, %c0_25] : memref<1x18xf32, #tpu.memory_space<vmem>>, vector<1x18xf32>
      %39 = vector.broadcast %38 : vector<1x18xf32> to vector<64x18xf32>
      %40 = arith.addf %37, %39 : vector<64x18xf32>
      %41 = vector.extract_strided_slice %40 {offsets = [0, 0], sizes = [64, 16], strides = [1, 1]} : vector<64x18xf32> to vector<64x16xf32>
      %c0_26 = arith.constant 0 : index
      %c0_27 = arith.constant 0 : index
      %42 = vector.load %arg12[%c0_26, %c0_27] : memref<64x16xf32, #tpu.memory_space<vmem>>, vector<64x16xf32>
      tpu.vector_store %arg12[%c0_26, %c0_27], %41 {strides = array<i32>} : memref<64x16xf32, #tpu.memory_space<vmem>>, vector<64x16xf32>,
      %43 = vector.extract_strided_slice %40 {offsets = [0, 16], sizes = [64, 2], strides = [1, 1]} : vector<64x18xf32> to vector<64x2xf32>
      %c0_28 = arith.constant 0 : index
      %c0_29 = arith.constant 0 : index
      %44 = vector.load %arg10[%c0_28, %c0_29] : memref<64x2xf32, #tpu.memory_space<vmem>>, vector<64x2xf32>
      tpu.vector_store %arg10[%c0_28, %c0_29], %43 {strides = array<i32>} : memref<64x2xf32, #tpu.memory_space<vmem>>, vector<64x2xf32>,
      %c0_30 = arith.constant 0 : index
      %c0_31 = arith.constant 0 : index
      %45 = vector.load %arg5[%c0_30, %c0_31] : memref<2x16xf32, #tpu.memory_space<vmem>>, vector<2x16xf32>
      %cst_32 = arith.constant dense<0.000000e+00> : vector<2x64xf32>
      %46 = tpu.matmul %45, %35, %cst_32 {dimension_numbers = #tpu.dot_dimension_numbers<[1], [1], [0], [0], [0, 0, 1, 0], [], []>} : vector<2x16xf32>, vector<64x16xf32>, vector<2x64xf32> -> vector<2x64xf32>
      %c0_33 = arith.constant 0 : index
      %c0_34 = arith.constant 0 : index
      %47 = vector.load %arg6[%c0_33, %c0_34] : memref<2x1xf32, #tpu.memory_space<vmem>>, vector<2x1xf32>
      %48 = vector.broadcast %47 : vector<2x1xf32> to vector<2x64xf32>
      %49 = arith.addf %46, %48 : vector<2x64xf32>
      %c0_35 = arith.constant 0 : index
      %c0_36 = arith.constant 0 : index
      %50 = vector.load %arg11[%c0_35, %c0_36] : memref<2x64xf32, #tpu.memory_space<vmem>>, vector<2x64xf32>
      tpu.vector_store %arg11[%c0_35, %c0_36], %49 {strides = array<i32>} : memref<2x64xf32, #tpu.memory_space<vmem>>, vector<2x64xf32>,
    } else {
    }
    %c32_i32 = arith.constant 32 : i32
    %3 = arith.muli %arg1, %c32_i32 : i32
    %4 = tpu.assume_multiple %3, 32 : i32
    %5 = arith.index_cast %4 : i32 to index
    %c0 = arith.constant 0 : index
    %6 = vector.load %arg10[%5, %c0] : memref<64x2xf32, #tpu.memory_space<vmem>>, vector<32x2xf32>
    %c0_1 = arith.constant 0 : index
    %c0_2 = arith.constant 0 : index
    %7 = vector.load %arg11[%c0_1, %c0_2] : memref<2x64xf32, #tpu.memory_space<vmem>>, vector<2x64xf32>
    %cst = arith.constant dense<0.000000e+00> : vector<32x64xf32>
    %8 = tpu.matmul %6, %7, %cst {dimension_numbers = #tpu.dot_dimension_numbers<[1], [0], [0], [1], [0, 0, 1, 1], [], []>} : vector<32x2xf32>, vector<2x64xf32>, vector<32x64xf32> -> vector<32x64xf32>
    %cst_3 = arith.constant dense<0xFF800000> : vector<32xf32>
    %9 = vector.multi_reduction <maximumf>, %8, %cst_3 [1] : vector<32x64xf32> to vector<32xf32>
    %10 = vector.shape_cast %9 : vector<32xf32> to vector<32x1xf32>
    %11 = vector.broadcast %10 : vector<32x1xf32> to vector<32x64xf32>
    %12 = arith.subf %8, %11 : vector<32x64xf32>
    %13 = math.exp %12 : vector<32x64xf32>
    %cst_4 = arith.constant dense<0.000000e+00> : vector<32xf32>
    %14 = vector.multi_reduction <add>, %13, %cst_4 [1] : vector<32x64xf32> to vector<32xf32>
    %15 = vector.shape_cast %14 : vector<32xf32> to vector<32x1xf32>
    %16 = tpu.reciprocal %15 : vector<32x1xf32> -> vector<32x1xf32>
    %c0_5 = arith.constant 0 : index
    %17 = arith.index_cast %4 : i32 to index
    %c0_6 = arith.constant 0 : index
    %18 = vector.load %arg2[%c0_5, %17, %c0_6] : memref<1x64x16xf32, #tpu.memory_space<vmem>>, vector<1x32x16xf32>
    %19 = vector.shape_cast %18 : vector<1x32x16xf32> to vector<32x16xf32>
    %c0_7 = arith.constant 0 : index
    %c0_8 = arith.constant 0 : index
    %20 = memref.load %arg7[%c0_7, %c0_8] : memref<1x1xf32, #tpu.memory_space<smem>>
    %21 = vector.broadcast %16 : vector<32x1xf32> to vector<32x64xf32>
    %22 = arith.mulf %13, %21 : vector<32x64xf32>
    %c0_9 = arith.constant 0 : index
    %c0_10 = arith.constant 0 : index
    %c0_11 = arith.constant 0 : index
    %23 = vector.load %arg9[%c0_9, %c0_10, %c0_11] : memref<1x32x64xf32, #tpu.memory_space<vmem>>, vector<1x32x64xf32>
    %24 = vector.shape_cast %23 : vector<1x32x64xf32> to vector<32x64xf32>
    %25 = vector.shape_cast %22 : vector<32x64xf32> to vector<1x32x64xf32>
    tpu.vector_store %arg9[%c0_9, %c0_10, %c0_11], %25 {strides = array<i32>} : memref<1x32x64xf32, #tpu.memory_space<vmem>>, vector<1x32x64xf32>,
    %c0_12 = arith.constant 0 : index
    %c0_13 = arith.constant 0 : index
    %26 = vector.load %arg12[%c0_12, %c0_13] : memref<64x16xf32, #tpu.memory_space<vmem>>, vector<64x16xf32>
    %cst_14 = arith.constant dense<0.000000e+00> : vector<32x16xf32>
    %27 = tpu.matmul %22, %26, %cst_14 {dimension_numbers = #tpu.dot_dimension_numbers<[1], [0], [0], [1], [0, 0, 1, 1], [], []>} : vector<32x64xf32>, vector<64x16xf32>, vector<32x16xf32> -> vector<32x16xf32>
    %28 = vector.broadcast %20 : f32 to vector<32x16xf32>
    %29 = arith.mulf %28, %27 : vector<32x16xf32>
    %30 = arith.addf %29, %19 : vector<32x16xf32>
    %c0_15 = arith.constant 0 : index
    %c0_16 = arith.constant 0 : index
    %c0_17 = arith.constant 0 : index
    %31 = vector.load %arg8[%c0_15, %c0_16, %c0_17] : memref<1x32x16xf32, #tpu.memory_space<vmem>>, vector<1x32x16xf32>
    %32 = vector.shape_cast %31 : vector<1x32x16xf32> to vector<32x16xf32>
    %33 = vector.shape_cast %30 : vector<32x16xf32> to vector<1x32x16xf32>
    tpu.vector_store %arg8[%c0_15, %c0_16, %c0_17], %33 {strides = array<i32>} : memref<1x32x16xf32, #tpu.memory_space<vmem>>, vector<1x32x16xf32>,
    return
  }
  func.func @transform_0(%arg0: i32, %arg1: i32) -> (i32, i32, i32) {
    %c0_i32 = arith.constant 0 : i32
    %c0_i32_0 = arith.constant 0 : i32
    %c0_i32_1 = arith.constant 0 : i32
    return %arg0, %c0_i32, %c0_i32_0 : i32, i32, i32
  }
  func.func @transform_1(%arg0: i32, %arg1: i32) -> (i32, i32) {
    %c0_i32 = arith.constant 0 : i32
    %c0_i32_0 = arith.constant 0 : i32
    %c0_i32_1 = arith.constant 0 : i32
    return %c0_i32, %c0_i32_0 : i32, i32
  }
  func.func @transform_2(%arg0: i32, %arg1: i32) -> (i32, i32) {
    %c0_i32 = arith.constant 0 : i32
    %c0_i32_0 = arith.constant 0 : i32
    %c0_i32_1 = arith.constant 0 : i32
    return %c0_i32, %c0_i32_0 : i32, i32
  }
  func.func @transform_3(%arg0: i32, %arg1: i32) -> (i32, i32) {
    %c0_i32 = arith.constant 0 : i32
    %c0_i32_0 = arith.constant 0 : i32
    %c0_i32_1 = arith.constant 0 : i32
    return %c0_i32, %c0_i32_0 : i32, i32
  }
  func.func @transform_4(%arg0: i32, %arg1: i32) -> (i32, i32) {
    %c0_i32 = arith.constant 0 : i32
    %c0_i32_0 = arith.constant 0 : i32
    %c0_i32_1 = arith.constant 0 : i32
    return %c0_i32, %c0_i32_0 : i32, i32
  }
  func.func @transform_5(%arg0: i32, %arg1: i32) -> (i32, i32) {
    %c0_i32 = arith.constant 0 : i32
    %c0_i32_0 = arith.constant 0 : i32
    %c0_i32_1 = arith.constant 0 : i32
    return %c0_i32, %c0_i32_0 : i32, i32
  }
  func.func @transform_6(%arg0: i32, %arg1: i32) -> (i32, i32, i32) {
    %c0_i32 = arith.constant 0 : i32
    %c0_i32_0 = arith.constant 0 : i32
    return %arg0, %arg1, %c0_i32 : i32, i32, i32
  }
  func.func @transform_7(%arg0: i32, %arg1: i32) -> (i32, i32, i32) {
    %c0_i32 = arith.constant 0 : i32
    %c0_i32_0 = arith.constant 0 : i32
    return %arg0, %arg1, %c0_i32 : i32, i32, i32
  }
}

</mosaic_0001>

<llo_original>
// kernel: self_attn.1
$region0: #{self_attn.1}
  #allocation0 [shape = 'u32[]', space=smem, size = 0x4, offset = 0x4, fixed_abs, tag = 'smem constant byte address 0x4 - core index']
  #allocation1 [shape = 'u32[72,128]{1,0:T(1,128)}', space=vmem, size = 0x9000, scoped, tag = 'internal scratch']
  #allocation2 [shape = 'f32[64,2]{1,0:T(8,128)}', space=vmem, size = 0x8000, scoped, tag = 'scratch operand']
  #allocation3 [shape = 'f32[2,64]{1,0:T(2,128)}', space=vmem, size = 0x400, scoped, tag = 'scratch operand']
  #allocation4 [shape = 'f32[64,16]{1,0:T(8,128)}', space=vmem, size = 0x8000, scoped, tag = 'scratch operand']
  #allocation5 [shape = 'f32[1,1]{1,0:T(1,128)S(6)}', space=smem, size = 0x200, scoped, tag = 'scoped memory for self_attn.1']
  %s0 = inlined_call_operand.hbm [shape: f32[2,64,16], index: 0, kind: input, shape index: {}]
  %s1 = inlined_call_operand.vmem [shape: f32[16,18], index: 1, kind: input, shape index: {}]
  %s2 = inlined_call_operand.vmem [shape: f32[1,18], index: 2, kind: input, shape index: {}]
  %s3 = inlined_call_operand.vmem [shape: f32[2,16], index: 3, kind: input, shape index: {}]
  %s4 = inlined_call_operand.vmem [shape: f32[2,1], index: 4, kind: input, shape index: {}]
  %s5 = inlined_call_operand.<no memory space> [shape: f32[1,1], index: 5, kind: input, shape index: {}]
  %s6 = inlined_call_operand.hbm [shape: f32[2,64,16], index: 6, kind: output, shape index: {0}]
  %s7 = inlined_call_operand.hbm [shape: f32[2,64,64], index: 7, kind: output, shape index: {1}]
  %8 = xla_tuple %s6, %s7
  %s9 = sld [smem:[#allocation0]]
  $region73: #{self_attn.1} parent=0
    _
  %s11 = ssub.s32 1, %s9
  %s12 = scalar_select 0, %s11, %s9
  %13 = sst [smem:[#allocation5]] %s5
  $region1: #{self_attn.1} parent=0
    #allocation6 [shape = 'u8[65536]{0}', space=vmem, size = 0x10000, scoped, tag = 'input window, operand 0']
    #allocation7 [shape = 's32[2]{0}', space=sflag, size = 0x8, scoped, tag = 'scoped memory for self_attn.1']
    #allocation8 [shape = 's32[2]{0}', space=sflag, size = 0x8, scoped, tag = 'scoped memory for self_attn.1']
    #allocation9 [shape = 'u8[32768]{0}', space=vmem, size = 0x8000, scoped, tag = 'output window, operand 0']
    #allocation10 [shape = 'u8[32768]{0}', space=vmem, size = 0x8000, scoped, tag = 'output window, operand 1']
    #allocation11 [shape = 's32[2]{0}', space=sflag, size = 0x8, scoped, tag = 'scoped memory for self_attn.1']
    %14 = vsyncpa [#allocation7], 0
    %s15 = scalar_lea.sflag [#allocation7], 1
    %16 = vsyncpa %s15, 0
    %17 = vsyncpa [#allocation8], 0
    %s18 = scalar_lea.sflag [#allocation8], 1
    %19 = vsyncpa %s18, 0
    %20 = vsyncpa [#allocation11], 0
    %s21 = scalar_lea.sflag [#allocation11], 1
    %22 = vsyncpa %s21, 0
    loop: start=0, step=1, limit=6
    $region2: #{self_attn.1} parent=1 // loop_pre_header
      _
    $region3: #{self_attn.1} parent=1 // loop_header
      %s24 = sphi 0, %s28
      %p25 = scmp.ge.s32.totalorder %s24, 6
      %s31 = sphi 0, %s43
      %s32 = sphi 0, %s39
      %s33 = sphi 0, %s31
      %s34 = sphi 0, %s32
      %s35 = sphi 0, %s33
      %s36 = sphi 0, %s34
      %s46 = sphi 0, %s48
      %s49 = sphi 0, %s46
      %s50 = sphi 0, %s49
      %s66 = sphi 0, %s50
      %s70 = sphi 0, %s70
      %s72 = sphi 0, %s70
      %s73 = sphi 0, %s72
      %s87 = sphi 0, %s73
      %s91 = sphi 0, %s91
      %s93 = sphi 0, %s91
      %s94 = sphi 0, %s93
      %s108 = sphi 0, %s94
      %s112 = sphi 0, %s112
      %s114 = sphi 0, %s112
      %s115 = sphi 0, %s114
      %s129 = sphi 0, %s115
      %s133 = sphi 0, %s133
      %s135 = sphi 0, %s133
      %s136 = sphi 0, %s135
      %s150 = sphi 0, %s136
      %s154 = sphi 0, %s154
      %s156 = sphi 0, %s154
      %s157 = sphi 0, %s156
      %s171 = sphi 0, %s157
      %s179 = sphi 0, %s181
      %s182 = sphi 0, %s179
      %s183 = sphi 0, %s182
      %s199 = sphi 0, %s183
      %s207 = sphi 0, %s209
      %s210 = sphi 0, %s207
      %s211 = sphi 0, %s210
      %s227 = sphi 0, %s211
    $region4: #{self_attn.1} parent=1 // loop_header_branch
      %27 = sbr.rel (%p25) target = $region8
    $region5: #{self_attn.1} parent=1 // loop_body
      %s29 = ssub.s32 %s24, 1
      %s30 = ssub.s32 %s24, 2
      %s37 = sadd.s32 1, %s32
      %p38 = scmp.ge.s32.totalorder %s37, 2
      %s39 = scalar_select %p38, 0, %s37
      %s40 = sadd.s32 1, %s31
      %s41 = scalar_select %p38, %s40, %s31
      %p42 = scmp.ge.s32.totalorder %s41, 2
      %s43 = scalar_select %p42, 0, %s41
      %s44 = ssub.s32 %s31, %s43
      %p45 = scmp.eq.s32.totalorder %s44, 0
      %s47 = sadd.s32 %s46, 1
      %s48 = scalar_select %p45, %s46, %s47
      %p51 = pneg %p45
      %p52 = scmp.eq.s32.totalorder %s24, 3
      %p53 = por %p51, %p52
      %p54 = scmp.ne.s32.totalorder %s46, %s49
      %p55 = scmp.eq.s32.totalorder %s24, 0
      %p56 = por %p54, %p55
      %p57 = scmp.ne.s32.totalorder %s46, %s49
      %p58 = scmp.eq.s32.totalorder %s29, 3
      %p59 = por %p57, %p58
      %p60 = scmp.ne.s32.totalorder %s49, %s50
      %p61 = scmp.eq.s32.totalorder %s29, 0
      %p62 = por %p60, %p61
      %p63 = scmp.ne.s32.totalorder %s49, %s50
      %p64 = scmp.eq.s32.totalorder %s30, 3
      %p65 = por %p63, %p64
      %p67 = scmp.ne.s32.totalorder %s50, %s66
      %p68 = scmp.eq.s32.totalorder %s30, 0
      %p69 = por %p67, %p68
      %s71 = sadd.s32 %s70, 1
      %p74 = scmp.eq.s32.totalorder %s24, 3
      %p75 = scmp.ne.s32.totalorder %s70, %s72
      %p76 = scmp.eq.s32.totalorder %s24, 0
      %p77 = por %p75, %p76
      %p78 = scmp.ne.s32.totalorder %s70, %s72
      %p79 = scmp.eq.s32.totalorder %s29, 3
      %p80 = por %p78, %p79
      %p81 = scmp.ne.s32.totalorder %s72, %s73
      %p82 = scmp.eq.s32.totalorder %s29, 0
      %p83 = por %p81, %p82
      %p84 = scmp.ne.s32.totalorder %s72, %s73
      %p85 = scmp.eq.s32.totalorder %s30, 3
      %p86 = por %p84, %p85
      %p88 = scmp.ne.s32.totalorder %s73, %s87
      %p89 = scmp.eq.s32.totalorder %s30, 0
      %p90 = por %p88, %p89
      %s92 = sadd.s32 %s91, 1
      %p95 = scmp.eq.s32.totalorder %s24, 3
      %p96 = scmp.ne.s32.totalorder %s91, %s93
      %p97 = scmp.eq.s32.totalorder %s24, 0
      %p98 = por %p96, %p97
      %p99 = scmp.ne.s32.totalorder %s91, %s93
      %p100 = scmp.eq.s32.totalorder %s29, 3
      %p101 = por %p99, %p100
      %p102 = scmp.ne.s32.totalorder %s93, %s94
      %p103 = scmp.eq.s32.totalorder %s29, 0
      %p104 = por %p102, %p103
      %p105 = scmp.ne.s32.totalorder %s93, %s94
      %p106 = scmp.eq.s32.totalorder %s30, 3
      %p107 = por %p105, %p106
      %p109 = scmp.ne.s32.totalorder %s94, %s108
      %p110 = scmp.eq.s32.totalorder %s30, 0
      %p111 = por %p109, %p110
      %s113 = sadd.s32 %s112, 1
      %p116 = scmp.eq.s32.totalorder %s24, 3
      %p117 = scmp.ne.s32.totalorder %s112, %s114
      %p118 = scmp.eq.s32.totalorder %s24, 0
      %p119 = por %p117, %p118
      %p120 = scmp.ne.s32.totalorder %s112, %s114
      %p121 = scmp.eq.s32.totalorder %s29, 3
      %p122 = por %p120, %p121
      %p123 = scmp.ne.s32.totalorder %s114, %s115
      %p124 = scmp.eq.s32.totalorder %s29, 0
      %p125 = por %p123, %p124
      %p126 = scmp.ne.s32.totalorder %s114, %s115
      %p127 = scmp.eq.s32.totalorder %s30, 3
      %p128 = por %p126, %p127
      %p130 = scmp.ne.s32.totalorder %s115, %s129
      %p131 = scmp.eq.s32.totalorder %s30, 0
      %p132 = por %p130, %p131
      %s134 = sadd.s32 %s133, 1
      %p137 = scmp.eq.s32.totalorder %s24, 3
      %p138 = scmp.ne.s32.totalorder %s133, %s135
      %p139 = scmp.eq.s32.totalorder %s24, 0
      %p140 = por %p138, %p139
      %p141 = scmp.ne.s32.totalorder %s133, %s135
      %p142 = scmp.eq.s32.totalorder %s29, 3
      %p143 = por %p141, %p142
      %p144 = scmp.ne.s32.totalorder %s135, %s136
      %p145 = scmp.eq.s32.totalorder %s29, 0
      %p146 = por %p144, %p145
      %p147 = scmp.ne.s32.totalorder %s135, %s136
      %p148 = scmp.eq.s32.totalorder %s30, 3
      %p149 = por %p147, %p148
      %p151 = scmp.ne.s32.totalorder %s136, %s150
      %p152 = scmp.eq.s32.totalorder %s30, 0
      %p153 = por %p151, %p152
      %s155 = sadd.s32 %s154, 1
      %p158 = scmp.eq.s32.totalorder %s24, 3
      %p159 = scmp.ne.s32.totalorder %s154, %s156
      %p160 = scmp.eq.s32.totalorder %s24, 0
      %p161 = por %p159, %p160
      %p162 = scmp.ne.s32.totalorder %s154, %s156
      %p163 = scmp.eq.s32.totalorder %s29, 3
      %p164 = por %p162, %p163
      %p165 = scmp.ne.s32.totalorder %s156, %s157
      %p166 = scmp.eq.s32.totalorder %s29, 0
      %p167 = por %p165, %p166
      %p168 = scmp.ne.s32.totalorder %s156, %s157
      %p169 = scmp.eq.s32.totalorder %s30, 3
      %p170 = por %p168, %p169
      %p172 = scmp.ne.s32.totalorder %s157, %s171
      %p173 = scmp.eq.s32.totalorder %s30, 0
      %p174 = por %p172, %p173
      %s175 = ssub.s32 %s31, %s43
      %s176 = ssub.s32 %s32, %s39
      %s177 = sor.u32 %s175, %s176
      %p178 = scmp.eq.s32.totalorder %s177, 0
      %s180 = sadd.s32 %s179, 1
      %s181 = scalar_select %p178, %s179, %s180
      %p184 = pneg %p178
      %p185 = scmp.eq.s32.totalorder %s24, 3
      %p186 = por %p184, %p185
      %p187 = scmp.ne.s32.totalorder %s179, %s182
      %p188 = scmp.eq.s32.totalorder %s24, 0
      %p189 = por %p187, %p188
      %p190 = scmp.ne.s32.totalorder %s179, %s182
      %p191 = scmp.eq.s32.totalorder %s29, 3
      %p192 = por %p190, %p191
      %p193 = scmp.ne.s32.totalorder %s182, %s183
      %p194 = scmp.eq.s32.totalorder %s29, 0
      %p195 = por %p193, %p194
      %p196 = scmp.ne.s32.totalorder %s182, %s183
      %p197 = scmp.eq.s32.totalorder %s30, 3
      %p198 = por %p196, %p197
      %p200 = scmp.ne.s32.totalorder %s183, %s199
      %p201 = scmp.eq.s32.totalorder %s30, 0
      %p202 = por %p200, %p201
      %s203 = ssub.s32 %s31, %s43
      %s204 = ssub.s32 %s32, %s39
      %s205 = sor.u32 %s203, %s204
      %p206 = scmp.eq.s32.totalorder %s205, 0
      %s208 = sadd.s32 %s207, 1
      %s209 = scalar_select %p206, %s207, %s208
      %p212 = pneg %p206
      %p213 = scmp.eq.s32.totalorder %s24, 3
      %p214 = por %p212, %p213
      %p215 = scmp.ne.s32.totalorder %s207, %s210
      %p216 = scmp.eq.s32.totalorder %s24, 0
      %p217 = por %p215, %p216
      %p218 = scmp.ne.s32.totalorder %s207, %s210
      %p219 = scmp.eq.s32.totalorder %s29, 3
      %p220 = por %p218, %p219
      %p221 = scmp.ne.s32.totalorder %s210, %s211
      %p222 = scmp.eq.s32.totalorder %s29, 0
      %p223 = por %p221, %p222
      %p224 = scmp.ne.s32.totalorder %s210, %s211
      %p225 = scmp.eq.s32.totalorder %s30, 3
      %p226 = por %p224, %p225
      %p228 = scmp.ne.s32.totalorder %s211, %s227
      %p229 = scmp.eq.s32.totalorder %s30, 0
      %p230 = por %p228, %p229
      %p231 = scmp.le.s32.totalorder 1, %s24
      %p232 = scmp.lt.s32.totalorder %s24, 5
      %p233 = pnand %p231, %p232
      %p234 = pneg %p233
      // Predicated region
      $region9: #{self_attn.1} parent=5 // pred_check
        _
      $region10: #{self_attn.1} parent=5 // pred_check_branch
        %236 = sbr.rel (%p233) target = $region12
      $region11: #{self_attn.1} parent=5 // pred_region
        %s237 = ssub.s32 %s24, 1
        // Predicated region
        $region13: #{self_attn.1} parent=11 // pred_check
          %p238 = pneg %p83
        $region14: #{self_attn.1} parent=11 // pred_check_branch
          %240 = sbr.rel (%p238) target = $region16
        $region15: #{self_attn.1} parent=11 // pred_region
          _
        $region16: #{self_attn.1} parent=11 // pred_fallthru
          _
        // Predicated region
        $region17: #{self_attn.1} parent=11 // pred_check
          %p241 = pneg %p104
        $region18: #{self_attn.1} parent=11 // pred_check_branch
          %243 = sbr.rel (%p241) target = $region20
        $region19: #{self_attn.1} parent=11 // pred_region
          _
        $region20: #{self_attn.1} parent=11 // pred_fallthru
          _
        // Predicated region
        $region21: #{self_attn.1} parent=11 // pred_check
          %p244 = pneg %p125
        $region22: #{self_attn.1} parent=11 // pred_check_branch
          %246 = sbr.rel (%p244) target = $region24
        $region23: #{self_attn.1} parent=11 // pred_region
          _
        $region24: #{self_attn.1} parent=11 // pred_fallthru
          _
        // Predicated region
        $region25: #{self_attn.1} parent=11 // pred_check
          %p247 = pneg %p146
        $region26: #{self_attn.1} parent=11 // pred_check_branch
          %249 = sbr.rel (%p247) target = $region28
        $region27: #{self_attn.1} parent=11 // pred_region
          _
        $region28: #{self_attn.1} parent=11 // pred_fallthru
          _
        // Predicated region
        $region29: #{self_attn.1} parent=11 // pred_check
          %p250 = pneg %p167
        $region30: #{self_attn.1} parent=11 // pred_check_branch
          %252 = sbr.rel (%p250) target = $region32
        $region31: #{self_attn.1} parent=11 // pred_region
          _
        $region32: #{self_attn.1} parent=11 // pred_fallthru
          _
      $region12: #{self_attn.1} parent=5 // pred_fallthru
        _
      %p253 = scmp.lt.s32.totalorder %s24, 4
      // Predicated region
      $region33: #{self_attn.1} parent=5 // pred_check
        %p254 = pneg %p253
      $region34: #{self_attn.1} parent=5 // pred_check_branch
        %256 = sbr.rel (%p254) target = $region36
      $region35: #{self_attn.1} parent=5 // pred_region
        // Predicated region
        $region37: #{self_attn.1} parent=35 // pred_check
          %p257 = pneg %p56
        $region38: #{self_attn.1} parent=35 // pred_check_branch
          %259 = sbr.rel (%p257) target = $region40
        $region39: #{self_attn.1} parent=35 // pred_region
          %s260 = sand.u32 %s46, 1
          %s261 = scalar_lea.sflag [#allocation7], %s260
          %s262 = sand.u32 %s46, 1
          %s263 = smul.addr %s262, 64
          %s264 = scalar_lea.vmem [#allocation6], %s263
          %266 = vsyncadd %s261, 0
          %s267 = smul.addr %s31, 8
          %s268 = smul.addr %s267, 8
          %s269 = scalar_lea.hbm %s0, %s268
          %s270 = sshll.u32 %s269, 4
          %s271 = int_to_ptr.hbm [resolvable:$true] %s270
          %s272 = sshll.u32 %s264, 4
          %s273 = int_to_ptr.vmem [resolvable:$true] %s272
          %278 = dma.hbm_to_vmem [thread:$0]  %s271, 1024, %s273, %s261, 128, 128, 8
        $region40: #{self_attn.1} parent=35 // pred_fallthru
          _
      $region36: #{self_attn.1} parent=5 // pred_fallthru
        _
      %p279 = scmp.le.s32.totalorder 1, %s24
      %p280 = scmp.lt.s32.totalorder %s24, 5
      %p281 = pnand %p279, %p280
      %p282 = pneg %p281
      // Predicated region
      $region41: #{self_attn.1} parent=5 // pred_check
        _
      $region42: #{self_attn.1} parent=5 // pred_check_branch
        %284 = sbr.rel (%p281) target = $region44
      $region43: #{self_attn.1} parent=5 // pred_region
        %s285 = ssub.s32 %s24, 1
        %s286 = sand.u32 %s49, 1
        %s287 = scalar_lea.sflag [#allocation7], %s286
        %s288 = sand.u32 %s49, 1
        %s289 = smul.addr %s288, 64
        %s290 = scalar_lea.vmem [#allocation6], %s289
        // Predicated region
        $region45: #{self_attn.1} parent=43 // pred_check
          %p291 = pneg %p62
        $region46: #{self_attn.1} parent=43 // pred_check_branch
          %293 = sbr.rel (%p291) target = $region48
        $region47: #{self_attn.1} parent=43 // pred_region
          %295 = dma.done %s287, 1024
        $region48: #{self_attn.1} parent=43 // pred_fallthru
          _
        %s296 = sand.u32 %s49, 1
        %s297 = scalar_lea.sflag [#allocation7], %s296
        %s298 = sand.u32 %s49, 1
        %s299 = smul.addr %s298, 64
        %s300 = scalar_lea.vmem [#allocation6], %s299
        %p301 = pneg %p62
        %p302 = pneg %p59
        %p303 = pneg %p83
        %p304 = pneg %p80
        %p305 = pneg %p104
        %p306 = pneg %p101
        %p307 = pneg %p125
        %p308 = pneg %p122
        %p309 = pneg %p146
        %p310 = pneg %p143
        %p311 = pneg %p167
        %p312 = pneg %p164
        %p313 = pneg %p195
        %p314 = pneg %p192
        %s315 = sand.u32 %s182, 1
        %s316 = scalar_lea.sflag [#allocation8], %s315
        %s317 = sand.u32 %s182, 1
        %s318 = smul.addr %s317, 32
        %s319 = scalar_lea.vmem [#allocation9], %s318
        %p320 = pneg %p223
        %p321 = pneg %p220
        %s322 = sand.u32 %s210, 1
        %s323 = scalar_lea.sflag [#allocation11], %s322
        %s324 = sand.u32 %s210, 1
        %s325 = smul.addr %s324, 32
        %s326 = scalar_lea.vmem [#allocation10], %s325
        %s327 = smul.u32 4, %s34
        %s328 = smul.u32 4, %s34
        %p329 = scmp.eq.s32.totalorder %s34, 0
        // Predicated region
        $region49: #{self_attn.1} parent=43 // pred_check
          %p330 = pneg %p329
        $region50: #{self_attn.1} parent=43 // pred_check_branch
          %332 = sbr.rel (%p330) target = $region52
        $region51: #{self_attn.1} parent=43 // pred_region
          %v333 = vld [vmem:[%s290] sm:$0xff]
          %v334 = vld [vmem:[%s290 + $0x8] sm:$0xff]
          %v335 = vld [vmem:[%s290 + $0x10] sm:$0xff]
          %v336 = vld [vmem:[%s290 + $0x18] sm:$0xff]
          %v337 = vld [vmem:[%s290 + $0x20] sm:$0xff]
          %v338 = vld [vmem:[%s290 + $0x28] sm:$0xff]
          %v339 = vld [vmem:[%s290 + $0x30] sm:$0xff]
          %v340 = vld [vmem:[%s290 + $0x38] sm:$0xff]
          %v341 = vld [vmem:[%s1] sm:$0xff]
          %v342 = vld [vmem:[%s1 + $0x8] sm:$0xff]
          %v343 = vld [vmem:[%s2] sm:$0x1]
          %v345 = vperm.slane %v343, 0
          %vm347 = vcmask 130048
          %v349 = vsel %vm347, %v333, 0
          %v352 = vsel %vm347, %v334, 0
          %v355 = vsel %vm347, %v335, 0
          %v358 = vsel %vm347, %v336, 0
          %v361 = vsel %vm347, %v337, 0
          %v364 = vsel %vm347, %v338, 0
          %v367 = vsel %vm347, %v339, 0
          %v370 = vsel %vm347, %v340, 0
          %372 = vmatpush.msra.mxu0 0.0
          %373 = vmatpush.msra.mxu0 0.0
          %374 = vmatpush.msra.mxu0 0.0
          %375 = vmatpush.msra.mxu0 0.0
          %376 = vmatpush.msra.mxu0 0.0
          %377 = vmatpush.msra.mxu0 0.0
          %378 = vmatpush.msra.mxu0 0.0
          %379 = vmatpush.msra.mxu0 0.0
          %380 = vmatpush.msra.mxu0 0.0
          %381 = vmatpush.msra.mxu0 0.0
          %382 = vmatpush.msra.mxu0 0.0
          %383 = vmatpush.msra.mxu0 0.0
          %384 = vmatpush.msra.mxu0 0.0
          %385 = vmatpush.msra.mxu0 0.0
          %386 = vmatpush.msra.mxu0 %v342
          %387 = vmatpush.msra.mxu0 %v341
          %388 = vmatmul.f32.gmra.mxu0 %v349
          %v389 = vpop.f32.mrf.mxu0
          %v390 = vadd.f32 %v345, %v389
          %391 = vmatmul.f32.gmra.mxu0 %v352
          %v392 = vpop.f32.mrf.mxu0
          %v393 = vadd.f32 %v345, %v392
          %394 = vmatmul.f32.gmra.mxu0 %v355
          %v395 = vpop.f32.mrf.mxu0
          %v396 = vadd.f32 %v345, %v395
          %397 = vmatmul.f32.gmra.mxu0 %v358
          %v398 = vpop.f32.mrf.mxu0
          %v399 = vadd.f32 %v345, %v398
          %400 = vmatmul.f32.gmra.mxu0 %v361
          %v401 = vpop.f32.mrf.mxu0
          %v402 = vadd.f32 %v345, %v401
          %403 = vmatmul.f32.gmra.mxu0 %v364
          %v404 = vpop.f32.mrf.mxu0
          %v405 = vadd.f32 %v345, %v404
          %406 = vmatmul.f32.gmra.mxu0 %v367
          %v407 = vpop.f32.mrf.mxu0
          %v408 = vadd.f32 %v345, %v407
          %409 = vmatmul.f32.gmra.mxu0 %v370
          %v410 = vpop.f32.mrf.mxu0
          %v411 = vadd.f32 %v345, %v410
          %412 = vdwg.mxu0
          %413 = vst.msk [vmem:[#allocation4] sm:$0xff] %vm347, %v390
          %414 = vst.msk [vmem:[#allocation4 + $0x8] sm:$0xff] %vm347, %v393
          %415 = vst.msk [vmem:[#allocation4 + $0x10] sm:$0xff] %vm347, %v396
          %416 = vst.msk [vmem:[#allocation4 + $0x18] sm:$0xff] %vm347, %v399
          %417 = vst.msk [vmem:[#allocation4 + $0x20] sm:$0xff] %vm347, %v402
          %418 = vst.msk [vmem:[#allocation4 + $0x28] sm:$0xff] %vm347, %v405
          %419 = vst.msk [vmem:[#allocation4 + $0x30] sm:$0xff] %vm347, %v408
          %420 = vst.msk [vmem:[#allocation4 + $0x38] sm:$0xff] %vm347, %v411
          %429 = vrot.lane.b32.xlu0 %v390, 112
          %v430 = vpop.permute.xlu0 %429
          %431 = vrot.lane.b32.xlu0 %v393, 112
          %v432 = vpop.permute.xlu0 %431
          %433 = vrot.lane.b32.xlu0 %v396, 112
          %v434 = vpop.permute.xlu0 %433
          %435 = vrot.lane.b32.xlu0 %v399, 112
          %v436 = vpop.permute.xlu0 %435
          %437 = vrot.lane.b32.xlu0 %v402, 112
          %v438 = vpop.permute.xlu0 %437
          %439 = vrot.lane.b32.xlu0 %v405, 112
          %v440 = vpop.permute.xlu0 %439
          %441 = vrot.lane.b32.xlu0 %v408, 112
          %v442 = vpop.permute.xlu0 %441
          %443 = vrot.lane.b32.xlu0 %v411, 112
          %v444 = vpop.permute.xlu0 %443
          %vm453 = vcmask 15360
          %454 = vst.msk [vmem:[#allocation2] sm:$0xff] %vm453, %v430
          %455 = vst.msk [vmem:[#allocation2 + $0x8] sm:$0xff] %vm453, %v432
          %456 = vst.msk [vmem:[#allocation2 + $0x10] sm:$0xff] %vm453, %v434
          %457 = vst.msk [vmem:[#allocation2 + $0x18] sm:$0xff] %vm453, %v436
          %458 = vst.msk [vmem:[#allocation2 + $0x20] sm:$0xff] %vm453, %v438
          %459 = vst.msk [vmem:[#allocation2 + $0x28] sm:$0xff] %vm453, %v440
          %460 = vst.msk [vmem:[#allocation2 + $0x30] sm:$0xff] %vm453, %v442
          %461 = vst.msk [vmem:[#allocation2 + $0x38] sm:$0xff] %vm453, %v444
          %v462 = vld [vmem:[%s3] sm:$0x3]
          %v463 = vld [vmem:[%s4] sm:$0x3]
          %465 = vset.pattern.permute.xlu0 0
          %466 = vperm.xlu0 %465, %v463
          %v467 = vpop.permute.xlu0 %466
          %v470 = vsel %vm347, %v462, 0
          %472 = vmatpush.xpose.msra.mxu0 0.0
          %473 = vmatpush.xpose.msra.mxu0 0.0
          %474 = vmatpush.xpose.msra.mxu0 0.0
          %475 = vmatpush.xpose.msra.mxu0 0.0
          %476 = vmatpush.xpose.msra.mxu0 0.0
          %477 = vmatpush.xpose.msra.mxu0 0.0
          %478 = vmatpush.xpose.msra.mxu0 0.0
          %479 = vmatpush.xpose.msra.mxu0 0.0
          %480 = vmatpush.xpose.msra.mxu0 %v370
          %481 = vmatpush.xpose.msra.mxu0 %v367
          %482 = vmatpush.xpose.msra.mxu0 %v364
          %483 = vmatpush.xpose.msra.mxu0 %v361
          %484 = vmatpush.xpose.msra.mxu0 %v358
          %485 = vmatpush.xpose.msra.mxu0 %v355
          %486 = vmatpush.xpose.msra.mxu0 %v352
          %487 = vmatpush.xpose.msra.mxu0 %v349
          %488 = vmatmul.f32.gmra.mxu0 %v470
          %v489 = vpop.f32.mrf.mxu0
          %v490 = vadd.f32 %v467, %v489
          %491 = vdwg.mxu0
          %vm492 = vcmask 517120
          %493 = vst.msk [vmem:[#allocation3] sm:$0x3] %vm492, %v490
        $region52: #{self_attn.1} parent=43 // pred_fallthru
          _
        %s494 = smul.u32 %s34, 32
        %s495 = scalar_lea.vmem [#allocation2], %s494
        %v496 = vld [vmem:[%s495] sm:$0xff]
        %v497 = vld [vmem:[%s495 + $0x8] sm:$0xff]
        %v498 = vld [vmem:[%s495 + $0x10] sm:$0xff]
        %v499 = vld [vmem:[%s495 + $0x18] sm:$0xff]
        %v500 = vld [vmem:[#allocation3] sm:$0x3]
        %vm501 = vcmask 15360
        %v503 = vsel %vm501, %v496, 0
        %v506 = vsel %vm501, %v497, 0
        %v509 = vsel %vm501, %v498, 0
        %v512 = vsel %vm501, %v499, 0
        %vm514 = vcmask 1041408
        %v516 = vsel %vm514, %v500, 0
        %518 = vmatpush.msra.mxu0 0.0
        %519 = vmatpush.msra.mxu0 0.0
        %520 = vmatpush.msra.mxu0 0.0
        %521 = vmatpush.msra.mxu0 0.0
        %522 = vmatpush.msra.mxu0 0.0
        %523 = vmatpush.msra.mxu0 0.0
        %524 = vmatpush.msra.mxu0 0.0
        %525 = vmatpush.msra.mxu0 0.0
        %526 = vmatpush.msra.mxu0 0.0
        %527 = vmatpush.msra.mxu0 0.0
        %528 = vmatpush.msra.mxu0 0.0
        %529 = vmatpush.msra.mxu0 0.0
        %530 = vmatpush.msra.mxu0 0.0
        %531 = vmatpush.msra.mxu0 0.0
        %532 = vmatpush.msra.mxu0 0.0
        %533 = vmatpush.msra.mxu0 %v516
        %534 = vmatmul.f32.gmra.mxu0 %v503
        %v535 = vpop.f32.mrf.mxu0
        %v536 = vadd.f32 0.0, %v535
        %537 = vmatmul.f32.gmra.mxu0 %v506
        %v538 = vpop.f32.mrf.mxu0
        %v539 = vadd.f32 0.0, %v538
        %540 = vmatmul.f32.gmra.mxu0 %v509
        %v541 = vpop.f32.mrf.mxu0
        %v542 = vadd.f32 0.0, %v541
        %543 = vmatmul.f32.gmra.mxu0 %v512
        %v544 = vpop.f32.mrf.mxu0
        %v545 = vadd.f32 0.0, %v544
        %546 = vdwg.mxu0
        %vm547 = vcmask 523264
        %v548 = vsel %vm547, %v536, -inf
        %549 = vmax.xlane.f32.xlu0 %v548
        %v550 = vpop.xlane.xlu0 %549
        %v551 = vsel %vm547, %v539, -inf
        %552 = vmax.xlane.f32.xlu0 %v551
        %v553 = vpop.xlane.xlu0 %552
        %v554 = vsel %vm547, %v542, -inf
        %555 = vmax.xlane.f32.xlu0 %v554
        %v556 = vpop.xlane.xlu0 %555
        %v557 = vsel %vm547, %v545, -inf
        %558 = vmax.xlane.f32.xlu0 %v557
        %v559 = vpop.xlane.xlu0 %558
        %v560 = vsub.f32 %v536, %v550
        %v561 = vsub.f32 %v539, %v553
        %v562 = vsub.f32 %v542, %v556
        %v563 = vsub.f32 %v545, %v559
        %v564 = vmul.f32 %v560, 1.442695
        %v565 = vpow.pop %v564
        %v566 = vmul.f32 %v561, 1.442695
        %v567 = vpow.pop %v566
        %v568 = vmul.f32 %v562, 1.442695
        %v569 = vpow.pop %v568
        %v570 = vmul.f32 %v563, 1.442695
        %v571 = vpow.pop %v570
        %v572 = vsel %vm547, %v565, 0.0
        %573 = vadd.xlane.f32.xlu0 %v572
        %v574 = vpop.xlane.xlu0 %573
        %v575 = vsel %vm547, %v567, 0.0
        %576 = vadd.xlane.f32.xlu0 %v575
        %v577 = vpop.xlane.xlu0 %576
        %v578 = vsel %vm547, %v569, 0.0
        %579 = vadd.xlane.f32.xlu0 %v578
        %v580 = vpop.xlane.xlu0 %579
        %v581 = vsel %vm547, %v571, 0.0
        %582 = vadd.xlane.f32.xlu0 %v581
        %v583 = vpop.xlane.xlu0 %582
        %v584 = vrcp.pop %v574
        %v585 = vmul.f32 %v574, %v584
        %v586 = vsub.f32 1.0, %v585
        %v587 = vmul.f32 %v584, %v586
        %v588 = vadd.f32 %v584, %v587
        %vm589 = vweird.f32 %v574
        %vm590 = vweird.f32 %v584
        %vm591 = vmor %vm589, %vm590
        %v592 = vsel %vm591, %v584, %v588
        %v593 = vand.u32 2147483647, %v574
        %vm594 = vcmp.eq.f32.partialorder %v593, 8.507059e+37
        %v595 = vand.u32 %v574, 2147483648
        %v596 = vor.u32 1.1754944e-38, %v595
        %v597 = vsel %vm594, %v596, %v592
        %v598 = vrcp.pop %v577
        %v599 = vmul.f32 %v577, %v598
        %v600 = vsub.f32 1.0, %v599
        %v601 = vmul.f32 %v598, %v600
        %v602 = vadd.f32 %v598, %v601
        %vm603 = vweird.f32 %v577
        %vm604 = vweird.f32 %v598
        %vm605 = vmor %vm603, %vm604
        %v606 = vsel %vm605, %v598, %v602
        %v607 = vand.u32 2147483647, %v577
        %vm608 = vcmp.eq.f32.partialorder %v607, 8.507059e+37
        %v609 = vand.u32 %v577, 2147483648
        %v610 = vor.u32 1.1754944e-38, %v609
        %v611 = vsel %vm608, %v610, %v606
        %v612 = vrcp.pop %v580
        %v613 = vmul.f32 %v580, %v612
        %v614 = vsub.f32 1.0, %v613
        %v615 = vmul.f32 %v612, %v614
        %v616 = vadd.f32 %v612, %v615
        %vm617 = vweird.f32 %v580
        %vm618 = vweird.f32 %v612
        %vm619 = vmor %vm617, %vm618
        %v620 = vsel %vm619, %v612, %v616
        %v621 = vand.u32 2147483647, %v580
        %vm622 = vcmp.eq.f32.partialorder %v621, 8.507059e+37
        %v623 = vand.u32 %v580, 2147483648
        %v624 = vor.u32 1.1754944e-38, %v623
        %v625 = vsel %vm622, %v624, %v620
        %v626 = vrcp.pop %v583
        %v627 = vmul.f32 %v583, %v626
        %v628 = vsub.f32 1.0, %v627
        %v629 = vmul.f32 %v626, %v628
        %v630 = vadd.f32 %v626, %v629
        %vm631 = vweird.f32 %v583
        %vm632 = vweird.f32 %v626
        %vm633 = vmor %vm631, %vm632
        %v634 = vsel %vm633, %v626, %v630
        %v635 = vand.u32 2147483647, %v583
        %vm636 = vcmp.eq.f32.partialorder %v635, 8.507059e+37
        %v637 = vand.u32 %v583, 2147483648
        %v638 = vor.u32 1.1754944e-38, %v637
        %v639 = vsel %vm636, %v638, %v634
        %s640 = scalar_lea.vmem %s290, %s494 [#allocation6]
        %v641 = vld [vmem:[%s640] sm:$0xff]
        %v642 = vld [vmem:[%s640 + $0x8] sm:$0xff]
        %v643 = vld [vmem:[%s640 + $0x10] sm:$0xff]
        %v644 = vld [vmem:[%s640 + $0x18] sm:$0xff]
        %s645 = sld [smem:[#allocation5]]
        %v646 = vmul.f32 %v565, %v597
        %v647 = vmul.f32 %v567, %v611
        %v648 = vmul.f32 %v569, %v625
        %v649 = vmul.f32 %v571, %v639
        %650 = vst.msk [vmem:[%s326] sm:$0xff] %vm547, %v646
        %651 = vst.msk [vmem:[%s326 + $0x8] sm:$0xff] %vm547, %v647
        %652 = vst.msk [vmem:[%s326 + $0x10] sm:$0xff] %vm547, %v648
        %653 = vst.msk [vmem:[%s326 + $0x18] sm:$0xff] %vm547, %v649
        %v654 = vld [vmem:[#allocation4] sm:$0xff]
        %v655 = vld [vmem:[#allocation4 + $0x8] sm:$0xff]
        %v656 = vld [vmem:[#allocation4 + $0x10] sm:$0xff]
        %v657 = vld [vmem:[#allocation4 + $0x18] sm:$0xff]
        %v658 = vld [vmem:[#allocation4 + $0x20] sm:$0xff]
        %v659 = vld [vmem:[#allocation4 + $0x28] sm:$0xff]
        %v660 = vld [vmem:[#allocation4 + $0x30] sm:$0xff]
        %v661 = vld [vmem:[#allocation4 + $0x38] sm:$0xff]
        %v663 = vsel %vm547, %v646, 0
        %v666 = vsel %vm547, %v647, 0
        %v669 = vsel %vm547, %v648, 0
        %v672 = vsel %vm547, %v649, 0
        %674 = vmatpush.msra.mxu0 0.0
        %675 = vmatpush.msra.mxu0 0.0
        %676 = vmatpush.msra.mxu0 0.0
        %677 = vmatpush.msra.mxu0 0.0
        %678 = vmatpush.msra.mxu0 0.0
        %679 = vmatpush.msra.mxu0 0.0
        %680 = vmatpush.msra.mxu0 0.0
        %681 = vmatpush.msra.mxu0 0.0
        %682 = vmatpush.msra.mxu0 %v661
        %683 = vmatpush.msra.mxu0 %v660
        %684 = vmatpush.msra.mxu0 %v659
        %685 = vmatpush.msra.mxu0 %v658
        %686 = vmatpush.msra.mxu0 %v657
        %687 = vmatpush.msra.mxu0 %v656
        %688 = vmatpush.msra.mxu0 %v655
        %689 = vmatpush.msra.mxu0 %v654
        %690 = vmatmul.f32.gmra.mxu0 %v663
        %v691 = vpop.f32.mrf.mxu0
        %v692 = vadd.f32 0.0, %v691
        %693 = vmatmul.f32.gmra.mxu0 %v666
        %v694 = vpop.f32.mrf.mxu0
        %v695 = vadd.f32 0.0, %v694
        %696 = vmatmul.f32.gmra.mxu0 %v669
        %v697 = vpop.f32.mrf.mxu0
        %v698 = vadd.f32 0.0, %v697
        %699 = vmatmul.f32.gmra.mxu0 %v672
        %v700 = vpop.f32.mrf.mxu0
        %v701 = vadd.f32 0.0, %v700
        %702 = vdwg.mxu0
        %v703 = vstv %s645
        %v704 = vmul.f32 %v703, %v692
        %v705 = vmul.f32 %v703, %v695
        %v706 = vmul.f32 %v703, %v698
        %v707 = vmul.f32 %v703, %v701
        %v708 = vadd.f32 %v704, %v641
        %v709 = vadd.f32 %v705, %v642
        %v710 = vadd.f32 %v706, %v643
        %v711 = vadd.f32 %v707, %v644
        %vm712 = vcmask 130048
        %713 = vst.msk [vmem:[%s319] sm:$0xff] %vm712, %v708
        %714 = vst.msk [vmem:[%s319 + $0x8] sm:$0xff] %vm712, %v709
        %715 = vst.msk [vmem:[%s319 + $0x10] sm:$0xff] %vm712, %v710
        %716 = vst.msk [vmem:[%s319 + $0x18] sm:$0xff] %vm712, %v711
        %s717 = sand.u32 %s182, 1
        %s718 = scalar_lea.sflag [#allocation8], %s717
        %s719 = sand.u32 %s182, 1
        %s720 = smul.addr %s719, 32
        %s721 = scalar_lea.vmem [#allocation9], %s720
        %s722 = sand.u32 %s210, 1
        %s723 = scalar_lea.sflag [#allocation11], %s722
        %s724 = sand.u32 %s210, 1
        %s725 = smul.addr %s724, 32
        %s726 = scalar_lea.vmem [#allocation10], %s725
        // Predicated region
        $region53: #{self_attn.1} parent=43 // pred_check
          %p727 = pneg %p192
        $region54: #{self_attn.1} parent=43 // pred_check_branch
          %729 = sbr.rel (%p727) target = $region56
        $region55: #{self_attn.1} parent=43 // pred_region
          %s730 = smul.u32 4, %s34
          %732 = vsyncadd %s718, 0
          %s733 = smul.addr %s33, 8
          %s734 = sadd.s32 %s730, %s733
          %s735 = smul.addr %s734, 8
          %s736 = scalar_lea.hbm %s6, %s735
          %s737 = sshll.u32 %s721, 4
          %s738 = int_to_ptr.vmem [resolvable:$true] %s737
          %s739 = sshll.u32 %s736, 4
          %s740 = int_to_ptr.hbm [resolvable:$true] %s739
          %745 = dma.vmem_to_hbm [thread:$0]  %s738, 512, %s740, %s718, 128, 128, 8
        $region56: #{self_attn.1} parent=43 // pred_fallthru
          _
        // Predicated region
        $region57: #{self_attn.1} parent=43 // pred_check
          %p746 = pneg %p220
        $region58: #{self_attn.1} parent=43 // pred_check_branch
          %748 = sbr.rel (%p746) target = $region60
        $region59: #{self_attn.1} parent=43 // pred_region
          %s749 = smul.u32 4, %s34
          %751 = vsyncadd %s723, 0
          %s752 = smul.addr %s33, 8
          %s753 = sadd.s32 %s749, %s752
          %s754 = smul.addr %s753, 8
          %s755 = scalar_lea.hbm %s7, %s754
          %s756 = sshll.u32 %s726, 4
          %s757 = int_to_ptr.vmem [resolvable:$true] %s756
          %s758 = sshll.u32 %s755, 4
          %s759 = int_to_ptr.hbm [resolvable:$true] %s758
          %764 = dma.vmem_to_hbm [thread:$0]  %s757, 512, %s759, %s723, 128, 128, 8
        $region60: #{self_attn.1} parent=43 // pred_fallthru
          _
      $region44: #{self_attn.1} parent=5 // pred_fallthru
        _
      %p765 = scmp.le.s32.totalorder 2, %s24
      // Predicated region
      $region61: #{self_attn.1} parent=5 // pred_check
        %p766 = pneg %p765
      $region62: #{self_attn.1} parent=5 // pred_check_branch
        %768 = sbr.rel (%p766) target = $region64
      $region63: #{self_attn.1} parent=5 // pred_region
        %s769 = ssub.s32 %s24, 2
        // Predicated region
        $region65: #{self_attn.1} parent=63 // pred_check
          %p770 = pneg %p198
        $region66: #{self_attn.1} parent=63 // pred_check_branch
          %772 = sbr.rel (%p770) target = $region68
        $region67: #{self_attn.1} parent=63 // pred_region
          %s773 = sand.u32 %s183, 1
          %s774 = scalar_lea.sflag [#allocation8], %s773
          %s775 = sand.u32 %s183, 1
          %s776 = smul.addr %s775, 32
          %s777 = scalar_lea.vmem [#allocation9], %s776
          %779 = dma.done %s774, 512
        $region68: #{self_attn.1} parent=63 // pred_fallthru
          _
        // Predicated region
        $region69: #{self_attn.1} parent=63 // pred_check
          %p780 = pneg %p226
        $region70: #{self_attn.1} parent=63 // pred_check_branch
          %782 = sbr.rel (%p780) target = $region72
        $region71: #{self_attn.1} parent=63 // pred_region
          %s783 = sand.u32 %s211, 1
          %s784 = scalar_lea.sflag [#allocation11], %s783
          %s785 = sand.u32 %s211, 1
          %s786 = smul.addr %s785, 32
          %s787 = scalar_lea.vmem [#allocation10], %s786
          %789 = dma.done %s784, 512
        $region72: #{self_attn.1} parent=63 // pred_fallthru
          _
      $region64: #{self_attn.1} parent=5 // pred_fallthru
        _
    $region6: #{self_attn.1} parent=1 // loop_footer
      %s28 = sadd.s32 1, %s24
    $region7: #{self_attn.1} parent=1 // loop_footer_branch
      %23 = sbr.rel target = $region3
    $region8: #{self_attn.1} parent=1 // loop_exit
      _
    %790 = vsyncpa [#allocation7], 1
    %s791 = scalar_lea.sflag [#allocation7], 1
    %792 = vsyncpa %s791, 1
    %793 = vsyncpa [#allocation8], 1
    %s794 = scalar_lea.sflag [#allocation8], 1
    %795 = vsyncpa %s794, 1
    %796 = vsyncpa [#allocation11], 1
    %s797 = scalar_lea.sflag [#allocation11], 1
    %798 = vsyncpa %s797, 1

</llo_original>
